<compile_context>
chip_gen: v7x
topology: tpu7x:2x2x1
jax: 0.10.0
libtpu: 0.0.40
codegen_flags: <defaults>
</compile_context>

<pallas_src>
import jax
import jax.numpy as jnp
from jax.experimental import pallas as pl
from jax.experimental.pallas import tpu as pltpu


def _mlp_kernel(x_ref, w1_ref, b1_ref, w2_ref, b2_ref, w3_ref, b3_ref, o_ref):
    # In-kernel bf16 cast of the streamed f32 tile (cheap VPU work hidden
    # under the MXU); f32 accumulation throughout.
    x = x_ref[...].astype(jnp.bfloat16)

    # Layer 1: Linear(D -> 128) + ReLU   (Dropout = identity at eval).
    h1 = jnp.dot(x, w1_ref[...], preferred_element_type=jnp.float32)
    h1 = jnp.maximum(h1 + b1_ref[...], 0.0).astype(jnp.bfloat16)

    # Layer 2: Linear(128 -> 64) + ReLU (no lane padding; 64 lanes is fine).
    h2 = jnp.dot(h1, w2_ref[...], preferred_element_type=jnp.float32)
    h2 = jnp.maximum(h2 + b2_ref[...], 0.0).astype(jnp.bfloat16)

    # Layer 3: Linear(64 -> 1), weight-stationary: one [64,1] stationary load,
    # h2 rows streamed through the MXU -> [tile_b, 1] result block.
    out = jnp.dot(h2, w3_ref[...], preferred_element_type=jnp.float32)
    o_ref[...] = (out + b3_ref[...]).astype(o_ref.dtype)


def _round_up(n, m):
    return ((n + m - 1) // m) * m


def _choose_tiling(batch, tile_b_req):
    """Pick (tile_b, padded_batch). Minimizes padding; keeps >=4 grid steps
    for large batches so v7x's two TensorCores both get work."""
    tile_b_req = max(8, int(tile_b_req))
    n_tiles = pl.cdiv(batch, tile_b_req)
    if batch >= 2048:
        n_tiles = max(n_tiles, 4)          # v7x megacore occupancy
    tile_b = _round_up(pl.cdiv(batch, n_tiles), 8)
    return tile_b, n_tiles * tile_b


def prepare_params(params):
    """One-time weight prep (hoisted out of the per-call hot path):
    bf16 weights, f32 row-vector biases, column-form w3."""
    w1, b1, w2, b2, w3, b3 = params
    return (w1.astype(jnp.bfloat16),
            b1.reshape(1, -1).astype(jnp.float32),
            w2.astype(jnp.bfloat16),
            b2.reshape(1, -1).astype(jnp.float32),
            w3.reshape(-1, 1).astype(jnp.bfloat16),
            b3.reshape(1, 1).astype(jnp.float32))


def emission_model_forward(x, prepared_params, *, tile_b=4096):
    """x: [B, input_dim] float32 -> [B, 1] float32 (eval-mode forward)."""
    w1, b1, w2, b2, w3, b3 = prepared_params
    B, D = x.shape
    H1 = w1.shape[1]                      # 128
    H2 = w2.shape[1]                      # 64

    tile_b, b_pad = _choose_tiling(B, tile_b)
    if b_pad != B:
        x = jnp.pad(x, ((0, b_pad - B), (0, 0)))   # f32 pad, only when needed

    grid = (b_pad // tile_b,)
    const = lambda shape: pl.BlockSpec(shape, lambda i: (0, 0))  # VMEM-resident

    # VMEM budget: x/out double-buffered, f32+bf16 h1/h2 temporaries, resident
    # weights (x2 buffers); 2x headroom, clamped under v7x physical 64 MiB.
    x_bytes = jnp.dtype(x.dtype).itemsize
    vmem = 2 * tile_b * D * x_bytes + 2 * tile_b * 4
    vmem += tile_b * (H1 * 6 + H2 * 6 + 4)
    vmem += 2 * ((D * H1 + H1 * H2 + H2) * 2 + (H1 + H2 + 1) * 4)
    vmem_limit = int(min(max(2 * vmem, 16 << 20), 40 << 20))

    out = pl.pallas_call(
        _mlp_kernel,
        out_shape=jax.ShapeDtypeStruct((b_pad, 1), jnp.float32),
        grid=grid,
        in_specs=[
            pl.BlockSpec((tile_b, D), lambda i: (i, 0)),   # x: streamed per tile
            const((D, H1)), const((1, H1)),                # layer-1 weights/bias
            const((H1, H2)), const((1, H2)),               # layer-2 weights/bias
            const((H2, 1)), const((1, 1)),                 # layer-3 weights/bias
        ],
        out_specs=pl.BlockSpec((tile_b, 1), lambda i: (i, 0)),
        compiler_params=pltpu.CompilerParams(
            dimension_semantics=("parallel",),
            vmem_limit_bytes=vmem_limit),
    )(x, w1, b1, w2, b2, w3, b3)

    return out[:B]


def init_params(key, input_dim):
    """Deterministic synthetic parameters (PyTorch-Linear-like uniform init)."""
    ks = jax.random.split(key, 6)

    def linear(kw, kb, fan_in, fan_out):
        bound = 1.0 / jnp.sqrt(fan_in)
        w = jax.random.uniform(kw, (fan_in, fan_out), jnp.float32, -bound, bound)
        b = jax.random.uniform(kb, (1, fan_out), jnp.float32, -bound, bound)
        return w, b

    w1, b1 = linear(ks[0], ks[1], input_dim, 128)
    w2, b2 = linear(ks[2], ks[3], 128, 64)
    w3, b3 = linear(ks[4], ks[5], 64, 1)
    return (w1, b1, w2, b2, w3, b3)


def reference_forward(x, params):
    """Pure-JAX reference matching the kernel's bf16-input / f32-acc numerics."""
    w1, b1, w2, b2, w3, b3 = params
    h1 = jnp.dot(x.astype(jnp.bfloat16), w1.astype(jnp.bfloat16),
                 preferred_element_type=jnp.float32) + b1
    h1 = jnp.maximum(h1, 0.0)
    h2 = jnp.dot(h1.astype(jnp.bfloat16), w2.astype(jnp.bfloat16),
                 preferred_element_type=jnp.float32) + b2
    h2 = jnp.maximum(h2, 0.0)
    return jnp.dot(h2.astype(jnp.bfloat16), w3.astype(jnp.bfloat16),
                   preferred_element_type=jnp.float32) + b3


if __name__ == "__main__":
    # TODO(synk): real input_dim comes from 'preprocessor.pkl' (numeric features
    # + one-hot categories - 1, not loadable here); use a small synthetic value.
    INPUT_DIM = 32
    BATCH = 8

    key = jax.random.PRNGKey(0)
    k_x, k_p = jax.random.split(key)
    x = jax.random.normal(k_x, (BATCH, INPUT_DIM), jnp.float32)
    params = init_params(k_p, INPUT_DIM)

    prepared = prepare_params(params)         # hoisted one-time weight prep
    fwd = jax.jit(emission_model_forward)
    out = jax.block_until_ready(fwd(x, prepared))

    ref = reference_forward(x, params)
    assert out.shape == (BATCH, 1), out.shape
    assert jnp.allclose(out, ref, atol=1e-2, rtol=1e-2), "mismatch vs reference"

    print("KERNEL_OK")
</pallas_src>

<mosaic_0001>
module attributes {stable_mosaic.version = 11 : i64} {
  func.func @_mlp_kernel(%arg0: i32, %arg1: memref<8x32xf32, #tpu.memory_space<vmem>>, %arg2: memref<32x128xbf16, #tpu.memory_space<vmem>>, %arg3: memref<1x128xf32, #tpu.memory_space<vmem>>, %arg4: memref<128x64xbf16, #tpu.memory_space<vmem>>, %arg5: memref<1x64xf32, #tpu.memory_space<vmem>>, %arg6: memref<64x1xbf16, #tpu.memory_space<vmem>>, %arg7: memref<1x1xf32, #tpu.memory_space<vmem>>, %arg8: memref<8x1xf32, #tpu.memory_space<vmem>>) attributes {dimension_semantics = [#tpu.dimension_semantics<parallel>], iteration_bounds = array<i64: 1>, scalar_prefetch = 0 : i64, scratch_operands = 0 : i64, tpu.core_type = #tpu.core_type<tc>, window_params = [{transform_indices = @transform_0, window_bounds = array<i64: 8, 32>}, {pipeline_mode = #tpu.pipeline_mode<synchronous>, transform_indices = @transform_1, window_bounds = array<i64: 32, 128>}, {pipeline_mode = #tpu.pipeline_mode<synchronous>, transform_indices = @transform_2, window_bounds = array<i64: 1, 128>}, {pipeline_mode = #tpu.pipeline_mode<synchronous>, transform_indices = @transform_3, window_bounds = array<i64: 128, 64>}, {pipeline_mode = #tpu.pipeline_mode<synchronous>, transform_indices = @transform_4, window_bounds = array<i64: 1, 64>}, {pipeline_mode = #tpu.pipeline_mode<synchronous>, transform_indices = @transform_5, window_bounds = array<i64: 64, 1>}, {pipeline_mode = #tpu.pipeline_mode<synchronous>, transform_indices = @transform_6, window_bounds = array<i64: 1, 1>}, {transform_indices = @transform_7, window_bounds = array<i64: 8, 1>}]} {
    %c0 = arith.constant 0 : index
    %c0_0 = arith.constant 0 : index
    %0 = vector.load %arg1[%c0, %c0_0] : memref<8x32xf32, #tpu.memory_space<vmem>>, vector<8x32xf32>
    %1 = arith.truncf %0 : vector<8x32xf32> to vector<8x32xbf16>
    %c0_1 = arith.constant 0 : index
    %c0_2 = arith.constant 0 : index
    %2 = vector.load %arg2[%c0_1, %c0_2] : memref<32x128xbf16, #tpu.memory_space<vmem>>, vector<32x128xbf16>
    %cst = arith.constant dense<0.000000e+00> : vector<8x128xf32>
    %3 = tpu.matmul %1, %2, %cst {dimension_numbers = #tpu.dot_dimension_numbers<[1], [0], [0], [1], [0, 0, 1, 1], [], []>} : vector<8x32xbf16>, vector<32x128xbf16>, vector<8x128xf32> -> vector<8x128xf32>
    %c0_3 = arith.constant 0 : index
    %c0_4 = arith.constant 0 : index
    %4 = vector.load %arg3[%c0_3, %c0_4] : memref<1x128xf32, #tpu.memory_space<vmem>>, vector<1x128xf32>
    %5 = vector.broadcast %4 : vector<1x128xf32> to vector<8x128xf32>
    %6 = arith.addf %3, %5 : vector<8x128xf32>
    %cst_5 = arith.constant 0.000000e+00 : f32
    %7 = vector.broadcast %cst_5 : f32 to vector<8x128xf32>
    %8 = arith.maximumf %6, %7 : vector<8x128xf32>
    %9 = arith.truncf %8 : vector<8x128xf32> to vector<8x128xbf16>
    %c0_6 = arith.constant 0 : index
    %c0_7 = arith.constant 0 : index
    %10 = vector.load %arg4[%c0_6, %c0_7] : memref<128x64xbf16, #tpu.memory_space<vmem>>, vector<128x64xbf16>
    %cst_8 = arith.constant dense<0.000000e+00> : vector<8x64xf32>
    %11 = tpu.matmul %9, %10, %cst_8 {dimension_numbers = #tpu.dot_dimension_numbers<[1], [0], [0], [1], [0, 0, 1, 1], [], []>} : vector<8x128xbf16>, vector<128x64xbf16>, vector<8x64xf32> -> vector<8x64xf32>
    %c0_9 = arith.constant 0 : index
    %c0_10 = arith.constant 0 : index
    %12 = vector.load %arg5[%c0_9, %c0_10] : memref<1x64xf32, #tpu.memory_space<vmem>>, vector<1x64xf32>
    %13 = vector.broadcast %12 : vector<1x64xf32> to vector<8x64xf32>
    %14 = arith.addf %11, %13 : vector<8x64xf32>
    %cst_11 = arith.constant 0.000000e+00 : f32
    %15 = vector.broadcast %cst_11 : f32 to vector<8x64xf32>
    %16 = arith.maximumf %14, %15 : vector<8x64xf32>
    %17 = arith.truncf %16 : vector<8x64xf32> to vector<8x64xbf16>
    %c0_12 = arith.constant 0 : index
    %c0_13 = arith.constant 0 : index
    %18 = vector.load %arg6[%c0_12, %c0_13] : memref<64x1xbf16, #tpu.memory_space<vmem>>, vector<64x1xbf16>
    %cst_14 = arith.constant dense<0.000000e+00> : vector<8x1xf32>
    %19 = tpu.matmul %17, %18, %cst_14 {dimension_numbers = #tpu.dot_dimension_numbers<[1], [0], [0], [1], [0, 0, 1, 1], [], []>} : vector<8x64xbf16>, vector<64x1xbf16>, vector<8x1xf32> -> vector<8x1xf32>
    %c0_15 = arith.constant 0 : index
    %c0_16 = arith.constant 0 : index
    %20 = vector.load %arg7[%c0_15, %c0_16] : memref<1x1xf32, #tpu.memory_space<vmem>>, vector<1x1xf32>
    %21 = vector.broadcast %20 : vector<1x1xf32> to vector<8x1xf32>
    %22 = arith.addf %19, %21 : vector<8x1xf32>
    %c0_17 = arith.constant 0 : index
    %c0_18 = arith.constant 0 : index
    %23 = vector.load %arg8[%c0_17, %c0_18] : memref<8x1xf32, #tpu.memory_space<vmem>>, vector<8x1xf32>
    tpu.vector_store %arg8[%c0_17, %c0_18], %22 {strides = array<i32>} : memref<8x1xf32, #tpu.memory_space<vmem>>, vector<8x1xf32>,
    return
  }
  func.func @transform_0(%arg0: i32) -> (i32, i32) {
    %c0_i32 = arith.constant 0 : i32
    %c0_i32_0 = arith.constant 0 : i32
    return %arg0, %c0_i32 : i32, i32
  }
  func.func @transform_1(%arg0: i32) -> (i32, i32) {
    %c0_i32 = arith.constant 0 : i32
    %c0_i32_0 = arith.constant 0 : i32
    %c0_i32_1 = arith.constant 0 : i32
    return %c0_i32, %c0_i32_0 : i32, i32
  }
  func.func @transform_2(%arg0: i32) -> (i32, i32) {
    %c0_i32 = arith.constant 0 : i32
    %c0_i32_0 = arith.constant 0 : i32
    %c0_i32_1 = arith.constant 0 : i32
    return %c0_i32, %c0_i32_0 : i32, i32
  }
  func.func @transform_3(%arg0: i32) -> (i32, i32) {
    %c0_i32 = arith.constant 0 : i32
    %c0_i32_0 = arith.constant 0 : i32
    %c0_i32_1 = arith.constant 0 : i32
    return %c0_i32, %c0_i32_0 : i32, i32
  }
  func.func @transform_4(%arg0: i32) -> (i32, i32) {
    %c0_i32 = arith.constant 0 : i32
    %c0_i32_0 = arith.constant 0 : i32
    %c0_i32_1 = arith.constant 0 : i32
    return %c0_i32, %c0_i32_0 : i32, i32
  }
  func.func @transform_5(%arg0: i32) -> (i32, i32) {
    %c0_i32 = arith.constant 0 : i32
    %c0_i32_0 = arith.constant 0 : i32
    %c0_i32_1 = arith.constant 0 : i32
    return %c0_i32, %c0_i32_0 : i32, i32
  }
  func.func @transform_6(%arg0: i32) -> (i32, i32) {
    %c0_i32 = arith.constant 0 : i32
    %c0_i32_0 = arith.constant 0 : i32
    %c0_i32_1 = arith.constant 0 : i32
    return %c0_i32, %c0_i32_0 : i32, i32
  }
  func.func @transform_7(%arg0: i32) -> (i32, i32) {
    %c0_i32 = arith.constant 0 : i32
    %c0_i32_0 = arith.constant 0 : i32
    return %arg0, %c0_i32 : i32, i32
  }
}

</mosaic_0001>

<llo_original>
// kernel: emission_model_forward.1
$region0: #{emission_model_forward.1}
  #allocation0 [shape = 'u32[]', space=smem, size = 0x4, offset = 0x4, fixed_abs, tag = 'smem constant byte address 0x4 - core index']
  #allocation1 [shape = 'u32[144,128]{1,0:T(1,128)}', space=vmem, size = 0x12000, scoped, tag = 'internal scratch']
  #allocation2 [shape = 'f32[1,1]{1,0:T(1,128)S(1)}', space=vmem, size = 0x200, scoped, tag = 'scoped memory for emission_model_forward.1']
  %s0 = inlined_call_operand.vmem [shape: f32[8,32], index: 0, kind: input, shape index: {}]
  %s1 = inlined_call_operand.vmem [shape: bf16[32,128], index: 1, kind: input, shape index: {}]
  %s2 = inlined_call_operand.vmem [shape: f32[1,128], index: 2, kind: input, shape index: {}]
  %s3 = inlined_call_operand.vmem [shape: bf16[128,64], index: 3, kind: input, shape index: {}]
  %s4 = inlined_call_operand.vmem [shape: f32[1,64], index: 4, kind: input, shape index: {}]
  %s5 = inlined_call_operand.vmem [shape: bf16[64,1], index: 5, kind: input, shape index: {}]
  %s6 = inlined_call_operand.<no memory space> [shape: f32[1,1], index: 6, kind: input, shape index: {}]
  %s7 = inlined_call_operand.vmem [shape: f32[8,1], index: 7, kind: output, shape index: {}]
  %s8 = sld [smem:[#allocation0]]
  $region38: #{emission_model_forward.1} parent=0
    _
  %s10 = ssub.s32 1, %s8
  %s11 = scalar_select 0, %s10, %s8
  %v12 = vstv %s6
  %13 = vst [vmem:[#allocation2] sm:$0x1] %v12
  // Predicated region
  $region2: #{emission_model_forward.1} parent=0 // pred_check
    _
  $region3: #{emission_model_forward.1} parent=0 // pred_check_branch
    %15 = sbr.rel (0) target = $region5
  $region4: #{emission_model_forward.1} parent=0 // pred_region
    _
  $region5: #{emission_model_forward.1} parent=0 // pred_fallthru
    _
  // Predicated region
  $region6: #{emission_model_forward.1} parent=0 // pred_check
    _
  $region7: #{emission_model_forward.1} parent=0 // pred_check_branch
    %17 = sbr.rel (0) target = $region9
  $region8: #{emission_model_forward.1} parent=0 // pred_region
    _
  $region9: #{emission_model_forward.1} parent=0 // pred_fallthru
    _
  // Predicated region
  $region10: #{emission_model_forward.1} parent=0 // pred_check
    _
  $region11: #{emission_model_forward.1} parent=0 // pred_check_branch
    %19 = sbr.rel (0) target = $region13
  $region12: #{emission_model_forward.1} parent=0 // pred_region
    _
  $region13: #{emission_model_forward.1} parent=0 // pred_fallthru
    _
  // Predicated region
  $region14: #{emission_model_forward.1} parent=0 // pred_check
    _
  $region15: #{emission_model_forward.1} parent=0 // pred_check_branch
    %21 = sbr.rel (0) target = $region17
  $region16: #{emission_model_forward.1} parent=0 // pred_region
    _
  $region17: #{emission_model_forward.1} parent=0 // pred_fallthru
    _
  // Predicated region
  $region18: #{emission_model_forward.1} parent=0 // pred_check
    _
  $region19: #{emission_model_forward.1} parent=0 // pred_check_branch
    %23 = sbr.rel (0) target = $region21
  $region20: #{emission_model_forward.1} parent=0 // pred_region
    _
  $region21: #{emission_model_forward.1} parent=0 // pred_fallthru
    _
  // Predicated region
  $region22: #{emission_model_forward.1} parent=0 // pred_check
    _
  $region23: #{emission_model_forward.1} parent=0 // pred_check_branch
    %25 = sbr.rel (0) target = $region25
  $region24: #{emission_model_forward.1} parent=0 // pred_region
    _
  $region25: #{emission_model_forward.1} parent=0 // pred_fallthru
    _
  // Predicated region
  $region26: #{emission_model_forward.1} parent=0 // pred_check
    _
  $region27: #{emission_model_forward.1} parent=0 // pred_check_branch
    %27 = sbr.rel (0) target = $region29
  $region28: #{emission_model_forward.1} parent=0 // pred_region
    _
  $region29: #{emission_model_forward.1} parent=0 // pred_fallthru
    _
  %v29 = vld [vmem:[%s0] sm:$0xff]
  %v30 = vpack.c.bf16 %v29, %v29
  %v31 = vld [vmem:[%s1] sm:$0xf]
  %v32 = vld [vmem:[%s1 + $0x4] sm:$0xf]
  %v33 = vld [vmem:[%s1 + $0x8] sm:$0xf]
  %v34 = vld [vmem:[%s1 + $0xc] sm:$0xf]
  %v35 = vld [vmem:[%s2] sm:$0x1]
  %v37 = vlaneseq
  %v38 = vshrl.u32 %v37, 7
  %v39 = vsub.s32 0, %v38
  %v40 = vrot.slane %v35, %v39
  %v46 = vunpack.c.l.b16 %v31
  %v47 = vunpack.c.l.b16 %v32
  %v48 = vunpack.c.l.b16 %v33
  %v49 = vunpack.c.l.b16 %v34
  %v50 = vpack.c.b16 %v47, %v46
  %v51 = vpack.c.b16 %v49, %v48
  %vm54 = vcmask 261120
  %v56 = vsel %vm54, %v30, 0
  %58 = vmatprep.subr.bf16.mxu0 0
  %59 = vmatpush1.bf16.msra.mxu0 %v50
  %60 = vmatprep.subr.bf16.mxu0 0
  %61 = vmatpush1.bf16.msra.mxu0 %v51
  %62 = vmatprep.subr.bf16.mxu0 0
  %63 = vmatpush1.bf16.msra.mxu0 0
  %64 = vmatprep.subr.bf16.mxu0 0
  %65 = vmatpush1.bf16.msra.mxu0 0
  %66 = vmatprep.subr.bf16.mxu0 0
  %67 = vmatpush1.bf16.msra.mxu0 0
  %68 = vmatprep.subr.bf16.mxu0 0
  %69 = vmatpush1.bf16.msra.mxu0 0
  %70 = vmatprep.subr.bf16.mxu0 0
  %71 = vmatpush1.bf16.msra.mxu0 0
  %72 = vmatprep.subr.bf16.mxu0 0
  %73 = vmatpush1.bf16.msra.mxu0 0
  %74 = vmatprep.subr.bf16.mxu0 0
  %75 = vmatpush1.bf16.msra.mxu0 0
  %76 = vmatprep.subr.bf16.mxu0 0
  %77 = vmatpush1.bf16.msra.mxu0 0
  %78 = vmatprep.subr.bf16.mxu0 0
  %79 = vmatpush1.bf16.msra.mxu0 0
  %80 = vmatprep.subr.bf16.mxu0 0
  %81 = vmatpush1.bf16.msra.mxu0 0
  %82 = vmatprep.subr.bf16.mxu0 0
  %83 = vmatpush1.bf16.msra.mxu0 0
  %84 = vmatprep.subr.bf16.mxu0 0
  %85 = vmatpush1.bf16.msra.mxu0 0
  %86 = vmatprep.subr.bf16.mxu0 0
  %87 = vmatpush1.bf16.msra.mxu0 0
  %88 = vmatprep.subr.bf16.mxu0 0
  %89 = vmatpush1.bf16.msra.mxu0 0
  %90 = vmatprep.mubr.bf16.mxu0 0
  %91 = vmatmul.mubr.bf16.gmra.mrb[0].mxu0 %v56
  %v92 = vpop.f32.mrb[0].mxu0
  %v93 = vadd.f32 %v40, %v92
  %v94 = vpop.f32.mrb[0].mxu0
  %v95 = vpop.f32.mrb[0].mxu0
  %v96 = vpop.f32.mrb[0].mxu0
  %97 = vdwg.mxu0
  %v98 = vmax.f32 %v93, 0.0
  %v99 = vpack.c.bf16 %v98, %v98
  %v100 = vld [vmem:[%s3] sm:$0xf]
  %v101 = vld [vmem:[%s3 + $0x4] sm:$0xf]
  %v102 = vld [vmem:[%s3 + $0x8] sm:$0xf]
  %v103 = vld [vmem:[%s3 + $0xc] sm:$0xf]
  %v104 = vld [vmem:[%s3 + $0x10] sm:$0xf]
  %v105 = vld [vmem:[%s3 + $0x14] sm:$0xf]
  %v106 = vld [vmem:[%s3 + $0x18] sm:$0xf]
  %v107 = vld [vmem:[%s3 + $0x1c] sm:$0xf]
  %v108 = vld [vmem:[%s3 + $0x20] sm:$0xf]
  %v109 = vld [vmem:[%s3 + $0x24] sm:$0xf]
  %v110 = vld [vmem:[%s3 + $0x28] sm:$0xf]
  %v111 = vld [vmem:[%s3 + $0x2c] sm:$0xf]
  %v112 = vld [vmem:[%s3 + $0x30] sm:$0xf]
  %v113 = vld [vmem:[%s3 + $0x34] sm:$0xf]
  %v114 = vld [vmem:[%s3 + $0x38] sm:$0xf]
  %v115 = vld [vmem:[%s3 + $0x3c] sm:$0xf]
  %v116 = vld [vmem:[%s4] sm:$0x1]
  %v118 = vlaneseq
  %v119 = vshrl.u32 %v118, 7
  %v120 = vsub.s32 0, %v119
  %v121 = vrot.slane %v116, %v120
  %v139 = vunpack.c.l.b16 %v100
  %v140 = vunpack.c.l.b16 %v101
  %v141 = vunpack.c.l.b16 %v102
  %v142 = vunpack.c.l.b16 %v103
  %v143 = vunpack.c.l.b16 %v104
  %v144 = vunpack.c.l.b16 %v105
  %v145 = vunpack.c.l.b16 %v106
  %v146 = vunpack.c.l.b16 %v107
  %v147 = vunpack.c.l.b16 %v108
  %v148 = vunpack.c.l.b16 %v109
  %v149 = vunpack.c.l.b16 %v110
  %v150 = vunpack.c.l.b16 %v111
  %v151 = vunpack.c.l.b16 %v112
  %v152 = vunpack.c.l.b16 %v113
  %v153 = vunpack.c.l.b16 %v114
  %v154 = vunpack.c.l.b16 %v115
  %v155 = vpack.c.b16 %v140, %v139
  %v156 = vpack.c.b16 %v142, %v141
  %v157 = vpack.c.b16 %v144, %v143
  %v158 = vpack.c.b16 %v146, %v145
  %v159 = vpack.c.b16 %v148, %v147
  %v160 = vpack.c.b16 %v150, %v149
  %v161 = vpack.c.b16 %v152, %v151
  %v162 = vpack.c.b16 %v154, %v153
  %171 = vmatprep.subr.bf16.mxu0 0
  %172 = vmatpush1.bf16.msra.mxu0 %v155
  %173 = vmatprep.subr.bf16.mxu0 0
  %174 = vmatpush1.bf16.msra.mxu0 %v156
  %175 = vmatprep.subr.bf16.mxu0 0
  %176 = vmatpush1.bf16.msra.mxu0 %v157
  %177 = vmatprep.subr.bf16.mxu0 0
  %178 = vmatpush1.bf16.msra.mxu0 %v158
  %179 = vmatprep.subr.bf16.mxu0 0
  %180 = vmatpush1.bf16.msra.mxu0 %v159
  %181 = vmatprep.subr.bf16.mxu0 0
  %182 = vmatpush1.bf16.msra.mxu0 %v160
  %183 = vmatprep.subr.bf16.mxu0 0
  %184 = vmatpush1.bf16.msra.mxu0 %v161
  %185 = vmatprep.subr.bf16.mxu0 0
  %186 = vmatpush1.bf16.msra.mxu0 %v162
  %187 = vmatprep.subr.bf16.mxu0 0
  %188 = vmatpush1.bf16.msra.mxu0 0
  %189 = vmatprep.subr.bf16.mxu0 0
  %190 = vmatpush1.bf16.msra.mxu0 0
  %191 = vmatprep.subr.bf16.mxu0 0
  %192 = vmatpush1.bf16.msra.mxu0 0
  %193 = vmatprep.subr.bf16.mxu0 0
  %194 = vmatpush1.bf16.msra.mxu0 0
  %195 = vmatprep.subr.bf16.mxu0 0
  %196 = vmatpush1.bf16.msra.mxu0 0
  %197 = vmatprep.subr.bf16.mxu0 0
  %198 = vmatpush1.bf16.msra.mxu0 0
  %199 = vmatprep.subr.bf16.mxu0 0
  %200 = vmatpush1.bf16.msra.mxu0 0
  %201 = vmatprep.subr.bf16.mxu0 0
  %202 = vmatpush1.bf16.msra.mxu0 0
  %203 = vmatprep.mubr.bf16.mxu0 0
  %204 = vmatmul.mubr.bf16.gmra.mrb[0].mxu0 %v99
  %v205 = vpop.f32.mrb[0].mxu0
  %v206 = vadd.f32 %v121, %v205
  %v207 = vpop.f32.mrb[0].mxu0
  %v208 = vpop.f32.mrb[0].mxu0
  %v209 = vpop.f32.mrb[0].mxu0
  %210 = vdwg.mxu0
  %v211 = vmax.f32 %v206, 0.0
  %v212 = vpack.c.bf16 %v211, %v211
  %v213 = vld [vmem:[%s5] sm:$0xf]
  %v214 = vld [vmem:[%s5 + $0x4] sm:$0xf]
  %v215 = vld [vmem:[%s5 + $0x8] sm:$0xf]
  %v216 = vld [vmem:[%s5 + $0xc] sm:$0xf]
  %v217 = vld [vmem:[%s5 + $0x10] sm:$0xf]
  %v218 = vld [vmem:[%s5 + $0x14] sm:$0xf]
  %v219 = vld [vmem:[%s5 + $0x18] sm:$0xf]
  %v220 = vld [vmem:[%s5 + $0x1c] sm:$0xf]
  %v221 = vld [vmem:[#allocation2] sm:$0x1]
  %v223 = vlaneseq
  %v224 = vshrl.u32 %v223, 7
  %v225 = vsub.s32 0, %v224
  %v226 = vrot.slane %v221, %v225
  %v236 = vunpack.c.l.b16 %v213
  %v237 = vunpack.c.l.b16 %v214
  %v238 = vunpack.c.l.b16 %v215
  %v239 = vunpack.c.l.b16 %v216
  %v240 = vunpack.c.l.b16 %v217
  %v241 = vunpack.c.l.b16 %v218
  %v242 = vunpack.c.l.b16 %v219
  %v243 = vunpack.c.l.b16 %v220
  %v244 = vpack.c.b16 %v237, %v236
  %v245 = vpack.c.b16 %v239, %v238
  %v246 = vpack.c.b16 %v241, %v240
  %v247 = vpack.c.b16 %v243, %v242
  %vm252 = vcmask 523264
  %v254 = vsel %vm252, %v212, 0
  %256 = vmatprep.subr.bf16.mxu0 0
  %257 = vmatpush1.bf16.msra.mxu0 %v244
  %258 = vmatprep.subr.bf16.mxu0 0
  %259 = vmatpush1.bf16.msra.mxu0 %v245
  %260 = vmatprep.subr.bf16.mxu0 0
  %261 = vmatpush1.bf16.msra.mxu0 %v246
  %262 = vmatprep.subr.bf16.mxu0 0
  %263 = vmatpush1.bf16.msra.mxu0 %v247
  %264 = vmatprep.subr.bf16.mxu0 0
  %265 = vmatpush1.bf16.msra.mxu0 0
  %266 = vmatprep.subr.bf16.mxu0 0
  %267 = vmatpush1.bf16.msra.mxu0 0
  %268 = vmatprep.subr.bf16.mxu0 0
  %269 = vmatpush1.bf16.msra.mxu0 0
  %270 = vmatprep.subr.bf16.mxu0 0
  %271 = vmatpush1.bf16.msra.mxu0 0
  %272 = vmatprep.subr.bf16.mxu0 0
  %273 = vmatpush1.bf16.msra.mxu0 0
  %274 = vmatprep.subr.bf16.mxu0 0
  %275 = vmatpush1.bf16.msra.mxu0 0
  %276 = vmatprep.subr.bf16.mxu0 0
  %277 = vmatpush1.bf16.msra.mxu0 0
  %278 = vmatprep.subr.bf16.mxu0 0
  %279 = vmatpush1.bf16.msra.mxu0 0
  %280 = vmatprep.subr.bf16.mxu0 0
  %281 = vmatpush1.bf16.msra.mxu0 0
  %282 = vmatprep.subr.bf16.mxu0 0
  %283 = vmatpush1.bf16.msra.mxu0 0
  %284 = vmatprep.subr.bf16.mxu0 0
  %285 = vmatpush1.bf16.msra.mxu0 0
  %286 = vmatprep.subr.bf16.mxu0 0
  %287 = vmatpush1.bf16.msra.mxu0 0
  %288 = vmatprep.mubr.bf16.mxu0 0
  %289 = vmatmul.mubr.bf16.gmra.mrb[0].mxu0 %v254
  %v290 = vpop.f32.mrb[0].mxu0
  %v291 = vadd.f32 %v226, %v290
  %v292 = vpop.f32.mrb[0].mxu0
  %v293 = vpop.f32.mrb[0].mxu0
  %v294 = vpop.f32.mrb[0].mxu0
  %295 = vdwg.mxu0
  %vm296 = vcmask 7168
  %297 = vst.msk [vmem:[%s7] sm:$0xff] %vm296, %v291
  // Predicated region
  $region30: #{emission_model_forward.1} parent=0 // pred_check
    _
  $region31: #{emission_model_forward.1} parent=0 // pred_check_branch
    %299 = sbr.rel (0) target = $region33
  $region32: #{emission_model_forward.1} parent=0 // pred_region
    _
  $region33: #{emission_model_forward.1} parent=0 // pred_fallthru
    _
  // Predicated region
  $region34: #{emission_model_forward.1} parent=0 // pred_check
    _
  $region35: #{emission_model_forward.1} parent=0 // pred_check_branch
    %301 = sbr.rel (0) target = $region37
  $region36: #{emission_model_forward.1} parent=0 // pred_region
    _
  $region37: #{emission_model_forward.1} parent=0 // pred_fallthru
    _

</llo_original>
